<compile_context>
chip_gen: v5e
topology: v5e:2x2
jax: 0.10.0
libtpu: 0.0.40
codegen_flags: <defaults>
</compile_context>

<pallas_src>
import jax
import jax.numpy as jnp
from jax.experimental import pallas as pl
from jax.experimental.pallas import tpu as pltpu


def _gc1_kernel(adj_ref, x_ref, w1_ref, w23_ref, s23_ref, acc_ref):
    """Pass 1: support23[i] = (((adj @ x) @ W1) @ W23)[row tile i]."""
    k = pl.program_id(1)

    @pl.when(k == 0)
    def _():
        acc_ref[...] = jnp.zeros_like(acc_ref)

    # Accumulate (adj @ x) over the adj-column / x-row reduction axis.
    acc_ref[...] += jnp.dot(adj_ref[...], x_ref[...],
                            preferred_element_type=jnp.float32)

    @pl.when(k == pl.num_programs(1) - 1)
    def _():
        # Epilogue: tiny resident-weight matmuls (reassociated gc1, fused gc2/gc3 input).
        hidden1 = jnp.dot(acc_ref[...], w1_ref[...],
                          preferred_element_type=jnp.float32)
        s23_ref[...] = jnp.dot(hidden1, w23_ref[...],
                               preferred_element_type=jnp.float32).astype(s23_ref.dtype)


def _gc23_kernel(adj_ref, s23_ref, out_ref, acc_ref):
    """Pass 2: out23[i] = (adj @ support23)[row tile i]  -> packed [mu | logvar]."""
    k = pl.program_id(1)

    @pl.when(k == 0)
    def _():
        acc_ref[...] = jnp.zeros_like(acc_ref)

    acc_ref[...] += jnp.dot(adj_ref[...], s23_ref[...],
                            preferred_element_type=jnp.float32)

    @pl.when(k == pl.num_programs(1) - 1)
    def _():
        out_ref[...] = acc_ref[...].astype(out_ref.dtype)


def _pick_tile(n, target, align):
    """Largest tile <= target that is a multiple of `align` and divides n; else the full dim."""
    if n <= target or n % align != 0:
        return n
    t = min(target, n)
    t -= t % align
    while t >= align:
        if n % t == 0:
            return t
        t -= align
    return n


def gcn_model_vae_forward(x, adj, w1, w2, w3, *, tm=None, tk=None):
    """Fused GCN-VAE encoder forward (eval mode) on TPU via two tiled Pallas passes."""
    n, f_in = x.shape
    h1 = w1.shape[1]
    h2 = w2.shape[1]

    # Row tile (multiple of 8 sublanes) and reduction tile (multiple of 128 lanes),
    # falling back to full dims for small graphs.
    tm = tm if tm is not None else _pick_tile(n, 512, 8)
    tk = tk if tk is not None else _pick_tile(n, 512, 128)
    grid = (n // tm, n // tk)

    # Fuse gc2 / gc3 weights once: W23 = [W2 | W3]  -> one wide adj matmul downstream.
    w23 = jnp.concatenate([w2, w3], axis=1)  # (H1, 2*H2)

    dim_sem = pltpu.CompilerParams(dimension_semantics=("parallel", "arbitrary"))

    # Pass 1: support23 = ((adj @ x) @ W1) @ W23        -> [N, 2*H2]
    support23 = pl.pallas_call(
        _gc1_kernel,
        out_shape=jax.ShapeDtypeStruct((n, 2 * h2), jnp.float32),
        grid=grid,
        in_specs=[
            pl.BlockSpec((tm, tk), lambda i, k: (i, k)),      # adj row/col tile
            pl.BlockSpec((tk, f_in), lambda i, k: (k, 0)),    # x row tile (narrow, full width)
            pl.BlockSpec((f_in, h1), lambda i, k: (0, 0)),    # W1 resident
            pl.BlockSpec((h1, 2 * h2), lambda i, k: (0, 0)),  # W23 resident
        ],
        out_specs=pl.BlockSpec((tm, 2 * h2), lambda i, k: (i, 0)),
        scratch_shapes=[pltpu.VMEM((tm, f_in), jnp.float32)],
        compiler_params=dim_sem,
    )(adj, x, w1, w23)

    # Pass 2: out23 = adj @ support23                   -> packed [mu | logvar]
    out23 = pl.pallas_call(
        _gc23_kernel,
        out_shape=jax.ShapeDtypeStruct((n, 2 * h2), jnp.float32),
        grid=grid,
        in_specs=[
            pl.BlockSpec((tm, tk), lambda i, k: (i, k)),        # adj row/col tile
            pl.BlockSpec((tk, 2 * h2), lambda i, k: (k, 0)),    # support23 row tile
        ],
        out_specs=pl.BlockSpec((tm, 2 * h2), lambda i, k: (i, 0)),
        scratch_shapes=[pltpu.VMEM((tm, 2 * h2), jnp.float32)],
        compiler_params=dim_sem,
    )(adj, support23)

    mu = out23[:, :h2]
    logvar = out23[:, h2:]
    z = mu  # eval-mode reparameterize: z aliases mu (no duplicate buffer / writeback)
    return z, mu, logvar


def _glorot(key, shape):
    fan_in, fan_out = shape
    limit = jnp.sqrt(6.0 / (fan_in + fan_out)).astype(jnp.float32)
    return jax.random.uniform(key, shape, jnp.float32, -limit, limit)


if __name__ == "__main__":
    # Small shapes consistent with the module; N chosen so the 128-wide tiling
    # and the K-reduction accumulator path are actually exercised (grid = (2, 2)).
    N = 256
    input_feat_dim = 16
    hidden_dim1 = 32
    hidden_dim2 = 16

    key = jax.random.PRNGKey(0)
    kx, kadj, k1, k2, k3 = jax.random.split(key, 5)

    # Node features.
    x = jax.random.normal(kx, (N, input_feat_dim), dtype=jnp.float32)

    # Row-normalized dense adjacency with self-loops (typical GAE preprocessing).
    a = (jax.random.uniform(kadj, (N, N)) < 0.05).astype(jnp.float32)
    a = jnp.maximum(a, a.T)
    a = a + jnp.eye(N, dtype=jnp.float32)
    deg = jnp.sum(a, axis=1, keepdims=True)
    adj = a / deg

    # Deterministic Glorot-initialized GraphConvolution weights.
    w1 = _glorot(k1, (input_feat_dim, hidden_dim1))
    w2 = _glorot(k2, (hidden_dim1, hidden_dim2))
    w3 = _glorot(k3, (hidden_dim1, hidden_dim2))

    z, mu, logvar = gcn_model_vae_forward(x, adj, w1, w2, w3, tm=128, tk=128)
    jax.block_until_ready((z, mu, logvar))

    # Pure-JAX reference check (original, un-reassociated order).
    h1_ref = adj @ (x @ w1)
    mu_ref = adj @ (h1_ref @ w2)
    logvar_ref = adj @ (h1_ref @ w3)
    assert jnp.allclose(mu, mu_ref, atol=1e-4, rtol=1e-4)
    assert jnp.allclose(logvar, logvar_ref, atol=1e-4, rtol=1e-4)
    assert jnp.allclose(z, mu_ref, atol=1e-4, rtol=1e-4)

    print("KERNEL_OK")
</pallas_src>

<mosaic_0001>
module attributes {stable_mosaic.version = 11 : i64} {
  func.func @_gc1_kernel(%arg0: i32, %arg1: i32, %arg2: memref<128x128xf32, #tpu.memory_space<vmem>>, %arg3: memref<128x16xf32, #tpu.memory_space<vmem>>, %arg4: memref<16x32xf32, #tpu.memory_space<vmem>>, %arg5: memref<32x32xf32, #tpu.memory_space<vmem>>, %arg6: memref<128x32xf32, #tpu.memory_space<vmem>>, %arg7: memref<128x16xf32, #tpu.memory_space<vmem>>) attributes {dimension_semantics = [#tpu.dimension_semantics<parallel>, #tpu.dimension_semantics<arbitrary>], iteration_bounds = array<i64: 2, 2>, scalar_prefetch = 0 : i64, scratch_operands = 1 : i64, tpu.core_type = #tpu.core_type<tc>, window_params = [{transform_indices = @transform_0, window_bounds = array<i64: 128, 128>}, {transform_indices = @transform_1, window_bounds = array<i64: 128, 16>}, {pipeline_mode = #tpu.pipeline_mode<synchronous>, transform_indices = @transform_2, window_bounds = array<i64: 16, 32>}, {pipeline_mode = #tpu.pipeline_mode<synchronous>, transform_indices = @transform_3, window_bounds = array<i64: 32, 32>}, {transform_indices = @transform_4, window_bounds = array<i64: 128, 32>}]} {
    %c0_i32 = arith.constant 0 : i32
    %0 = arith.cmpi eq, %arg1, %c0_i32 : i32
    %1 = arith.extui %0 : i1 to i32
    %c0_i32_0 = arith.constant 0 : i32
    %2 = arith.cmpi ne, %1, %c0_i32_0 : i32
    scf.if %2 {
      %cst_9 = arith.constant 0.000000e+00 : f32
      %12 = vector.broadcast %cst_9 : f32 to vector<128x16xf32>
      %c0_10 = arith.constant 0 : index
      %c0_11 = arith.constant 0 : index
      %13 = vector.load %arg7[%c0_10, %c0_11] : memref<128x16xf32, #tpu.memory_space<vmem>>, vector<128x16xf32>
      tpu.vector_store %arg7[%c0_10, %c0_11], %12 {strides = array<i32>} : memref<128x16xf32, #tpu.memory_space<vmem>>, vector<128x16xf32>,
    } else {
    }
    %c0 = arith.constant 0 : index
    %c0_1 = arith.constant 0 : index
    %3 = vector.load %arg7[%c0, %c0_1] : memref<128x16xf32, #tpu.memory_space<vmem>>, vector<128x16xf32>
    %c0_2 = arith.constant 0 : index
    %c0_3 = arith.constant 0 : index
    %4 = vector.load %arg2[%c0_2, %c0_3] : memref<128x128xf32, #tpu.memory_space<vmem>>, vector<128x128xf32>
    %c0_4 = arith.constant 0 : index
    %c0_5 = arith.constant 0 : index
    %5 = vector.load %arg3[%c0_4, %c0_5] : memref<128x16xf32, #tpu.memory_space<vmem>>, vector<128x16xf32>
    %cst = arith.constant dense<0.000000e+00> : vector<128x16xf32>
    %6 = tpu.matmul %4, %5, %cst {dimension_numbers = #tpu.dot_dimension_numbers<[1], [0], [0], [1], [0, 0, 1, 1], [], []>} : vector<128x128xf32>, vector<128x16xf32>, vector<128x16xf32> -> vector<128x16xf32>
    %7 = arith.addf %3, %6 : vector<128x16xf32>
    %c0_6 = arith.constant 0 : index
    %c0_7 = arith.constant 0 : index
    %8 = vector.load %arg7[%c0_6, %c0_7] : memref<128x16xf32, #tpu.memory_space<vmem>>, vector<128x16xf32>
    tpu.vector_store %arg7[%c0_6, %c0_7], %7 {strides = array<i32>} : memref<128x16xf32, #tpu.memory_space<vmem>>, vector<128x16xf32>,
    %c1_i32 = arith.constant 1 : i32
    %9 = arith.cmpi eq, %arg1, %c1_i32 : i32
    %10 = arith.extui %9 : i1 to i32
    %c0_i32_8 = arith.constant 0 : i32
    %11 = arith.cmpi ne, %10, %c0_i32_8 : i32
    scf.if %11 {
      %c0_9 = arith.constant 0 : index
      %c0_10 = arith.constant 0 : index
      %12 = vector.load %arg7[%c0_9, %c0_10] : memref<128x16xf32, #tpu.memory_space<vmem>>, vector<128x16xf32>
      %c0_11 = arith.constant 0 : index
      %c0_12 = arith.constant 0 : index
      %13 = vector.load %arg4[%c0_11, %c0_12] : memref<16x32xf32, #tpu.memory_space<vmem>>, vector<16x32xf32>
      %cst_13 = arith.constant dense<0.000000e+00> : vector<128x32xf32>
      %14 = tpu.matmul %12, %13, %cst_13 {dimension_numbers = #tpu.dot_dimension_numbers<[1], [0], [0], [1], [0, 0, 1, 1], [], []>} : vector<128x16xf32>, vector<16x32xf32>, vector<128x32xf32> -> vector<128x32xf32>
      %c0_14 = arith.constant 0 : index
      %c0_15 = arith.constant 0 : index
      %15 = vector.load %arg5[%c0_14, %c0_15] : memref<32x32xf32, #tpu.memory_space<vmem>>, vector<32x32xf32>
      %cst_16 = arith.constant dense<0.000000e+00> : vector<128x32xf32>
      %16 = tpu.matmul %14, %15, %cst_16 {dimension_numbers = #tpu.dot_dimension_numbers<[1], [0], [0], [1], [0, 0, 1, 1], [], []>} : vector<128x32xf32>, vector<32x32xf32>, vector<128x32xf32> -> vector<128x32xf32>
      %c0_17 = arith.constant 0 : index
      %c0_18 = arith.constant 0 : index
      %17 = vector.load %arg6[%c0_17, %c0_18] : memref<128x32xf32, #tpu.memory_space<vmem>>, vector<128x32xf32>
      tpu.vector_store %arg6[%c0_17, %c0_18], %16 {strides = array<i32>} : memref<128x32xf32, #tpu.memory_space<vmem>>, vector<128x32xf32>,
    } else {
    }
    return
  }
  func.func @transform_0(%arg0: i32, %arg1: i32) -> (i32, i32) {
    %c0_i32 = arith.constant 0 : i32
    return %arg0, %arg1 : i32, i32
  }
  func.func @transform_1(%arg0: i32, %arg1: i32) -> (i32, i32) {
    %c0_i32 = arith.constant 0 : i32
    %c0_i32_0 = arith.constant 0 : i32
    return %arg1, %c0_i32 : i32, i32
  }
  func.func @transform_2(%arg0: i32, %arg1: i32) -> (i32, i32) {
    %c0_i32 = arith.constant 0 : i32
    %c0_i32_0 = arith.constant 0 : i32
    %c0_i32_1 = arith.constant 0 : i32
    return %c0_i32, %c0_i32_0 : i32, i32
  }
  func.func @transform_3(%arg0: i32, %arg1: i32) -> (i32, i32) {
    %c0_i32 = arith.constant 0 : i32
    %c0_i32_0 = arith.constant 0 : i32
    %c0_i32_1 = arith.constant 0 : i32
    return %c0_i32, %c0_i32_0 : i32, i32
  }
  func.func @transform_4(%arg0: i32, %arg1: i32) -> (i32, i32) {
    %c0_i32 = arith.constant 0 : i32
    %c0_i32_0 = arith.constant 0 : i32
    return %arg0, %c0_i32 : i32, i32
  }
}

</mosaic_0001>

<llo_original>
// kernel: tpu_custom_call.1
$region0: #{tpu_custom_call.1}
  #allocation0 [shape = 'u32[]', space=smem, size = 0x4, offset = 0x4, fixed_abs, tag = 'smem constant byte address 0x4 - core index']
  #allocation1 [shape = 'u32[72,128]{1,0:T(1,128)}', space=vmem, size = 0x9000, scoped, tag = 'internal scratch']
  #allocation2 [shape = 'f32[128,16]{1,0:T(8,128)}', space=vmem, size = 0x10000, scoped, tag = 'scratch operand']
  %s0 = inlined_call_operand.hbm [shape: f32[256,256], index: 0, kind: input, shape index: {}]
  %s1 = inlined_call_operand.vmem [shape: f32[256,16], index: 1, kind: input, shape index: {}]
  %s2 = inlined_call_operand.vmem [shape: f32[16,32], index: 2, kind: input, shape index: {}]
  %s3 = inlined_call_operand.vmem [shape: f32[32,32], index: 3, kind: input, shape index: {}]
  %s4 = inlined_call_operand.vmem [shape: f32[256,32], index: 4, kind: output, shape index: {}]
  %s5 = sld [smem:[#allocation0]]
  $region61: #{tpu_custom_call.1} parent=0
    _
  %s7 = ssub.s32 1, %s5
  %s8 = scalar_select 0, %s7, %s5
  $region1: #{tpu_custom_call.1} parent=0
    #allocation3 [shape = 'u8[131072]{0}', space=vmem, size = 0x20000, scoped, tag = 'input window, operand 0']
    #allocation4 [shape = 's32[2]{0}', space=sflag, size = 0x8, scoped, tag = 'scoped memory for tpu_custom_call.1']
    %9 = vsyncpa [#allocation4], 0
    %s10 = scalar_lea.sflag [#allocation4], 1
    %11 = vsyncpa %s10, 0
    loop: start=0, step=1, limit=6
    $region2: #{tpu_custom_call.1} parent=1 // loop_pre_header
      _
    $region3: #{tpu_custom_call.1} parent=1 // loop_header
      %s13 = sphi 0, %s17
      %p14 = scmp.ge.s32.totalorder %s13, 6
      %s20 = sphi 0, %s32
      %s21 = sphi 0, %s28
      %s22 = sphi 0, %s20
      %s23 = sphi 0, %s21
      %s24 = sphi 0, %s22
      %s25 = sphi 0, %s23
      %s37 = sphi 0, %s39
      %s40 = sphi 0, %s37
      %s41 = sphi 0, %s40
      %s57 = sphi 0, %s41
      %s63 = sphi 0, %s65
      %s66 = sphi 0, %s63
      %s67 = sphi 0, %s66
      %s83 = sphi 0, %s67
      %s87 = sphi 0, %s87
      %s89 = sphi 0, %s87
      %s90 = sphi 0, %s89
      %s104 = sphi 0, %s90
      %s108 = sphi 0, %s108
      %s110 = sphi 0, %s108
      %s111 = sphi 0, %s110
      %s125 = sphi 0, %s111
      %s131 = sphi 0, %s133
      %s134 = sphi 0, %s131
      %s135 = sphi 0, %s134
      %s151 = sphi 0, %s135
    $region4: #{tpu_custom_call.1} parent=1 // loop_header_branch
      %16 = sbr.rel (%p14) target = $region8
    $region5: #{tpu_custom_call.1} parent=1 // loop_body
      %s18 = ssub.s32 %s13, 1
      %s19 = ssub.s32 %s13, 2
      %s26 = sadd.s32 1, %s21
      %p27 = scmp.ge.s32.totalorder %s26, 2
      %s28 = scalar_select %p27, 0, %s26
      %s29 = sadd.s32 1, %s20
      %s30 = scalar_select %p27, %s29, %s20
      %p31 = scmp.ge.s32.totalorder %s30, 2
      %s32 = scalar_select %p31, 0, %s30
      %s33 = ssub.s32 %s20, %s32
      %s34 = ssub.s32 %s21, %s28
      %s35 = sor.u32 %s33, %s34
      %p36 = scmp.eq.s32.totalorder %s35, 0
      %s38 = sadd.s32 %s37, 1
      %s39 = scalar_select %p36, %s37, %s38
      %p42 = pneg %p36
      %p43 = scmp.eq.s32.totalorder %s13, 3
      %p44 = por %p42, %p43
      %p45 = scmp.ne.s32.totalorder %s37, %s40
      %p46 = scmp.eq.s32.totalorder %s13, 0
      %p47 = por %p45, %p46
      %p48 = scmp.ne.s32.totalorder %s37, %s40
      %p49 = scmp.eq.s32.totalorder %s18, 3
      %p50 = por %p48, %p49
      %p51 = scmp.ne.s32.totalorder %s40, %s41
      %p52 = scmp.eq.s32.totalorder %s18, 0
      %p53 = por %p51, %p52
      %p54 = scmp.ne.s32.totalorder %s40, %s41
      %p55 = scmp.eq.s32.totalorder %s19, 3
      %p56 = por %p54, %p55
      %p58 = scmp.ne.s32.totalorder %s41, %s57
      %p59 = scmp.eq.s32.totalorder %s19, 0
      %p60 = por %p58, %p59
      %s61 = ssub.s32 %s21, %s28
      %p62 = scmp.eq.s32.totalorder %s61, 0
      %s64 = sadd.s32 %s63, 1
      %s65 = scalar_select %p62, %s63, %s64
      %p68 = pneg %p62
      %p69 = scmp.eq.s32.totalorder %s13, 3
      %p70 = por %p68, %p69
      %p71 = scmp.ne.s32.totalorder %s63, %s66
      %p72 = scmp.eq.s32.totalorder %s13, 0
      %p73 = por %p71, %p72
      %p74 = scmp.ne.s32.totalorder %s63, %s66
      %p75 = scmp.eq.s32.totalorder %s18, 3
      %p76 = por %p74, %p75
      %p77 = scmp.ne.s32.totalorder %s66, %s67
      %p78 = scmp.eq.s32.totalorder %s18, 0
      %p79 = por %p77, %p78
      %p80 = scmp.ne.s32.totalorder %s66, %s67
      %p81 = scmp.eq.s32.totalorder %s19, 3
      %p82 = por %p80, %p81
      %p84 = scmp.ne.s32.totalorder %s67, %s83
      %p85 = scmp.eq.s32.totalorder %s19, 0
      %p86 = por %p84, %p85
      %s88 = sadd.s32 %s87, 1
      %p91 = scmp.eq.s32.totalorder %s13, 3
      %p92 = scmp.ne.s32.totalorder %s87, %s89
      %p93 = scmp.eq.s32.totalorder %s13, 0
      %p94 = por %p92, %p93
      %p95 = scmp.ne.s32.totalorder %s87, %s89
      %p96 = scmp.eq.s32.totalorder %s18, 3
      %p97 = por %p95, %p96
      %p98 = scmp.ne.s32.totalorder %s89, %s90
      %p99 = scmp.eq.s32.totalorder %s18, 0
      %p100 = por %p98, %p99
      %p101 = scmp.ne.s32.totalorder %s89, %s90
      %p102 = scmp.eq.s32.totalorder %s19, 3
      %p103 = por %p101, %p102
      %p105 = scmp.ne.s32.totalorder %s90, %s104
      %p106 = scmp.eq.s32.totalorder %s19, 0
      %p107 = por %p105, %p106
      %s109 = sadd.s32 %s108, 1
      %p112 = scmp.eq.s32.totalorder %s13, 3
      %p113 = scmp.ne.s32.totalorder %s108, %s110
      %p114 = scmp.eq.s32.totalorder %s13, 0
      %p115 = por %p113, %p114
      %p116 = scmp.ne.s32.totalorder %s108, %s110
      %p117 = scmp.eq.s32.totalorder %s18, 3
      %p118 = por %p116, %p117
      %p119 = scmp.ne.s32.totalorder %s110, %s111
      %p120 = scmp.eq.s32.totalorder %s18, 0
      %p121 = por %p119, %p120
      %p122 = scmp.ne.s32.totalorder %s110, %s111
      %p123 = scmp.eq.s32.totalorder %s19, 3
      %p124 = por %p122, %p123
      %p126 = scmp.ne.s32.totalorder %s111, %s125
      %p127 = scmp.eq.s32.totalorder %s19, 0
      %p128 = por %p126, %p127
      %s129 = ssub.s32 %s20, %s32
      %p130 = scmp.eq.s32.totalorder %s129, 0
      %s132 = sadd.s32 %s131, 1
      %s133 = scalar_select %p130, %s131, %s132
      %p136 = pneg %p130
      %p137 = scmp.eq.s32.totalorder %s13, 3
      %p138 = por %p136, %p137
      %p139 = scmp.ne.s32.totalorder %s131, %s134
      %p140 = scmp.eq.s32.totalorder %s13, 0
      %p141 = por %p139, %p140
      %p142 = scmp.ne.s32.totalorder %s131, %s134
      %p143 = scmp.eq.s32.totalorder %s18, 3
      %p144 = por %p142, %p143
      %p145 = scmp.ne.s32.totalorder %s134, %s135
      %p146 = scmp.eq.s32.totalorder %s18, 0
      %p147 = por %p145, %p146
      %p148 = scmp.ne.s32.totalorder %s134, %s135
      %p149 = scmp.eq.s32.totalorder %s19, 3
      %p150 = por %p148, %p149
      %p152 = scmp.ne.s32.totalorder %s135, %s151
      %p153 = scmp.eq.s32.totalorder %s19, 0
      %p154 = por %p152, %p153
      %p155 = scmp.le.s32.totalorder 1, %s13
      %p156 = scmp.lt.s32.totalorder %s13, 5
      %p157 = pnand %p155, %p156
      %p158 = pneg %p157
      // Predicated region
      $region9: #{tpu_custom_call.1} parent=5 // pred_check
        _
      $region10: #{tpu_custom_call.1} parent=5 // pred_check_branch
        %160 = sbr.rel (%p157) target = $region12
      $region11: #{tpu_custom_call.1} parent=5 // pred_region
        %s161 = ssub.s32 %s13, 1
        // Predicated region
        $region13: #{tpu_custom_call.1} parent=11 // pred_check
          %p162 = pneg %p100
        $region14: #{tpu_custom_call.1} parent=11 // pred_check_branch
          %164 = sbr.rel (%p162) target = $region16
        $region15: #{tpu_custom_call.1} parent=11 // pred_region
          _
        $region16: #{tpu_custom_call.1} parent=11 // pred_fallthru
          _
        // Predicated region
        $region17: #{tpu_custom_call.1} parent=11 // pred_check
          %p165 = pneg %p121
        $region18: #{tpu_custom_call.1} parent=11 // pred_check_branch
          %167 = sbr.rel (%p165) target = $region20
        $region19: #{tpu_custom_call.1} parent=11 // pred_region
          _
        $region20: #{tpu_custom_call.1} parent=11 // pred_fallthru
          _
      $region12: #{tpu_custom_call.1} parent=5 // pred_fallthru
        _
      %p168 = scmp.lt.s32.totalorder %s13, 4
      // Predicated region
      $region21: #{tpu_custom_call.1} parent=5 // pred_check
        %p169 = pneg %p168
      $region22: #{tpu_custom_call.1} parent=5 // pred_check_branch
        %171 = sbr.rel (%p169) target = $region24
      $region23: #{tpu_custom_call.1} parent=5 // pred_region
        // Predicated region
        $region25: #{tpu_custom_call.1} parent=23 // pred_check
          %p172 = pneg %p47
        $region26: #{tpu_custom_call.1} parent=23 // pred_check_branch
          %174 = sbr.rel (%p172) target = $region28
        $region27: #{tpu_custom_call.1} parent=23 // pred_region
          %s175 = sand.u32 %s37, 1
          %s176 = scalar_lea.sflag [#allocation4], %s175
          %s177 = sand.u32 %s37, 1
          %s178 = smul.addr %s177, 128
          %s179 = scalar_lea.vmem [#allocation3], %s178
          %s180 = smul.u32 16, %s20
          %182 = vsyncadd %s176, 0
          %s183 = smul.addr %s180, 2
          %s184 = sadd.s32 %s21, %s183
          %s185 = smul.addr %s184, 8
          %s186 = scalar_lea.hbm %s0, %s185
          %s187 = sshll.u32 %s186, 4
          %s188 = int_to_ptr.hbm [resolvable:$true] %s187
          %s189 = sshll.u32 %s179, 4
          %s190 = int_to_ptr.vmem [resolvable:$true] %s189
          %195 = dma.hbm_to_vmem [thread:$0]  %s188, 2048, %s190, %s176, 256, 128, 8
        $region28: #{tpu_custom_call.1} parent=23 // pred_fallthru
          _
        // Predicated region
        $region29: #{tpu_custom_call.1} parent=23 // pred_check
          %p196 = pneg %p73
        $region30: #{tpu_custom_call.1} parent=23 // pred_check_branch
          %198 = sbr.rel (%p196) target = $region32
        $region31: #{tpu_custom_call.1} parent=23 // pred_region
          %s199 = smul.u32 16, %s21
          %p200 = scmp.lt.s32.totalorder %s199, 31
          %s201 = scalar_select %p200, %s199, 31
          %s202 = smul.addr %s201, 8
          %s203 = scalar_lea.vmem %s1, %s202
          %s204 = smul.u32 16, %s21
        $region32: #{tpu_custom_call.1} parent=23 // pred_fallthru
          _
      $region24: #{tpu_custom_call.1} parent=5 // pred_fallthru
        _
      %p205 = scmp.le.s32.totalorder 1, %s13
      %p206 = scmp.lt.s32.totalorder %s13, 5
      %p207 = pnand %p205, %p206
      %p208 = pneg %p207
      // Predicated region
      $region33: #{tpu_custom_call.1} parent=5 // pred_check
        _
      $region34: #{tpu_custom_call.1} parent=5 // pred_check_branch
        %210 = sbr.rel (%p207) target = $region36
      $region35: #{tpu_custom_call.1} parent=5 // pred_region
        %s211 = ssub.s32 %s13, 1
        %s212 = sand.u32 %s40, 1
        %s213 = scalar_lea.sflag [#allocation4], %s212
        %s214 = sand.u32 %s40, 1
        %s215 = smul.addr %s214, 128
        %s216 = scalar_lea.vmem [#allocation3], %s215
        // Predicated region
        $region37: #{tpu_custom_call.1} parent=35 // pred_check
          %p217 = pneg %p53
        $region38: #{tpu_custom_call.1} parent=35 // pred_check_branch
          %219 = sbr.rel (%p217) target = $region40
        $region39: #{tpu_custom_call.1} parent=35 // pred_region
          %221 = dma.done %s213, 2048
        $region40: #{tpu_custom_call.1} parent=35 // pred_fallthru
          _
        %s222 = sand.u32 %s40, 1
        %s223 = scalar_lea.sflag [#allocation4], %s222
        %s224 = sand.u32 %s40, 1
        %s225 = smul.addr %s224, 128
        %s226 = scalar_lea.vmem [#allocation3], %s225
        %p227 = pneg %p53
        %p228 = pneg %p50
        %s229 = smul.u32 16, %s23
        %p230 = scmp.lt.s32.totalorder %s229, 31
        %s231 = scalar_select %p230, %s229, 31
        %s232 = smul.addr %s231, 8
        %s233 = scalar_lea.vmem %s1, %s232
        %p234 = pneg %p79
        %p235 = pneg %p76
        %p236 = pneg %p100
        %p237 = pneg %p97
        %p238 = pneg %p121
        %p239 = pneg %p118
        %p240 = pneg %p147
        %p241 = pneg %p144
        %s242 = smul.u32 16, %s22
        %p243 = scmp.lt.s32.totalorder %s242, 31
        %s244 = scalar_select %p243, %s242, 31
        %s245 = smul.addr %s244, 8
        %s246 = scalar_lea.vmem %s4, %s245
        %s247 = smul.u32 16, %s22
        %s248 = smul.u32 16, %s23
        %p249 = scmp.lt.s32.totalorder %s248, 31
        %s250 = scalar_select %p249, %s248, 31
        %s251 = smul.addr %s250, 8
        %s252 = scalar_lea.vmem %s1, %s251
        %s253 = smul.u32 16, %s23
        %s254 = smul.u32 16, %s22
        %p255 = scmp.lt.s32.totalorder %s254, 31
        %s256 = scalar_select %p255, %s254, 31
        %s257 = smul.addr %s256, 8
        %s258 = scalar_lea.vmem %s4, %s257
        %s259 = smul.u32 16, %s22
        %p260 = scmp.eq.s32.totalorder %s23, 0
        // Predicated region
        $region41: #{tpu_custom_call.1} parent=35 // pred_check
          %p261 = pneg %p260
        $region42: #{tpu_custom_call.1} parent=35 // pred_check_branch
          %263 = sbr.rel (%p261) target = $region44
        $region43: #{tpu_custom_call.1} parent=35 // pred_region
          %vm264 = vcmask 130048
          %265 = vst.msk [vmem:[#allocation2] sm:$0xff] %vm264, 0.0
          %266 = vst.msk [vmem:[#allocation2 + $0x8] sm:$0xff] %vm264, 0.0
          %267 = vst.msk [vmem:[#allocation2 + $0x10] sm:$0xff] %vm264, 0.0
          %268 = vst.msk [vmem:[#allocation2 + $0x18] sm:$0xff] %vm264, 0.0
          %269 = vst.msk [vmem:[#allocation2 + $0x20] sm:$0xff] %vm264, 0.0
          %270 = vst.msk [vmem:[#allocation2 + $0x28] sm:$0xff] %vm264, 0.0
          %271 = vst.msk [vmem:[#allocation2 + $0x30] sm:$0xff] %vm264, 0.0
          %272 = vst.msk [vmem:[#allocation2 + $0x38] sm:$0xff] %vm264, 0.0
          %273 = vst.msk [vmem:[#allocation2 + $0x40] sm:$0xff] %vm264, 0.0
          %274 = vst.msk [vmem:[#allocation2 + $0x48] sm:$0xff] %vm264, 0.0
          %275 = vst.msk [vmem:[#allocation2 + $0x50] sm:$0xff] %vm264, 0.0
          %276 = vst.msk [vmem:[#allocation2 + $0x58] sm:$0xff] %vm264, 0.0
          %277 = vst.msk [vmem:[#allocation2 + $0x60] sm:$0xff] %vm264, 0.0
          %278 = vst.msk [vmem:[#allocation2 + $0x68] sm:$0xff] %vm264, 0.0
          %279 = vst.msk [vmem:[#allocation2 + $0x70] sm:$0xff] %vm264, 0.0
          %280 = vst.msk [vmem:[#allocation2 + $0x78] sm:$0xff] %vm264, 0.0
        $region44: #{tpu_custom_call.1} parent=35 // pred_fallthru
          _
        %v281 = vld [vmem:[#allocation2] sm:$0xff]
        %v282 = vld [vmem:[#allocation2 + $0x8] sm:$0xff]
        %v283 = vld [vmem:[#allocation2 + $0x10] sm:$0xff]
        %v284 = vld [vmem:[#allocation2 + $0x18] sm:$0xff]
        %v285 = vld [vmem:[#allocation2 + $0x20] sm:$0xff]
        %v286 = vld [vmem:[#allocation2 + $0x28] sm:$0xff]
        %v287 = vld [vmem:[#allocation2 + $0x30] sm:$0xff]
        %v288 = vld [vmem:[#allocation2 + $0x38] sm:$0xff]
        %v289 = vld [vmem:[#allocation2 + $0x40] sm:$0xff]
        %v290 = vld [vmem:[#allocation2 + $0x48] sm:$0xff]
        %v291 = vld [vmem:[#allocation2 + $0x50] sm:$0xff]
        %v292 = vld [vmem:[#allocation2 + $0x58] sm:$0xff]
        %v293 = vld [vmem:[#allocation2 + $0x60] sm:$0xff]
        %v294 = vld [vmem:[#allocation2 + $0x68] sm:$0xff]
        %v295 = vld [vmem:[#allocation2 + $0x70] sm:$0xff]
        %v296 = vld [vmem:[#allocation2 + $0x78] sm:$0xff]
        %v297 = vld [vmem:[%s216] sm:$0xff]
        %v298 = vld [vmem:[%s216 + $0x8] sm:$0xff]
        %v299 = vld [vmem:[%s216 + $0x10] sm:$0xff]
        %v300 = vld [vmem:[%s216 + $0x18] sm:$0xff]
        %v301 = vld [vmem:[%s216 + $0x20] sm:$0xff]
        %v302 = vld [vmem:[%s216 + $0x28] sm:$0xff]
        %v303 = vld [vmem:[%s216 + $0x30] sm:$0xff]
        %v304 = vld [vmem:[%s216 + $0x38] sm:$0xff]
        %v305 = vld [vmem:[%s216 + $0x40] sm:$0xff]
        %v306 = vld [vmem:[%s216 + $0x48] sm:$0xff]
        %v307 = vld [vmem:[%s216 + $0x50] sm:$0xff]
        %v308 = vld [vmem:[%s216 + $0x58] sm:$0xff]
        %v309 = vld [vmem:[%s216 + $0x60] sm:$0xff]
        %v310 = vld [vmem:[%s216 + $0x68] sm:$0xff]
        %v311 = vld [vmem:[%s216 + $0x70] sm:$0xff]
        %v312 = vld [vmem:[%s216 + $0x78] sm:$0xff]
        %v313 = vld [vmem:[%s252] sm:$0xff]
        %v314 = vld [vmem:[%s252 + $0x8] sm:$0xff]
        %v315 = vld [vmem:[%s252 + $0x10] sm:$0xff]
        %v316 = vld [vmem:[%s252 + $0x18] sm:$0xff]
        %v317 = vld [vmem:[%s252 + $0x20] sm:$0xff]
        %v318 = vld [vmem:[%s252 + $0x28] sm:$0xff]
        %v319 = vld [vmem:[%s252 + $0x30] sm:$0xff]
        %v320 = vld [vmem:[%s252 + $0x38] sm:$0xff]
        %v321 = vld [vmem:[%s252 + $0x40] sm:$0xff]
        %v322 = vld [vmem:[%s252 + $0x48] sm:$0xff]
        %v323 = vld [vmem:[%s252 + $0x50] sm:$0xff]
        %v324 = vld [vmem:[%s252 + $0x58] sm:$0xff]
        %v325 = vld [vmem:[%s252 + $0x60] sm:$0xff]
        %v326 = vld [vmem:[%s252 + $0x68] sm:$0xff]
        %v327 = vld [vmem:[%s252 + $0x70] sm:$0xff]
        %v328 = vld [vmem:[%s252 + $0x78] sm:$0xff]
        %329 = vmatpush.msra.mxu0 %v328
        %330 = vmatpush.msra.mxu0 %v327
        %331 = vmatpush.msra.mxu0 %v326
        %332 = vmatpush.msra.mxu0 %v325
        %333 = vmatpush.msra.mxu0 %v324
        %334 = vmatpush.msra.mxu0 %v323
        %335 = vmatpush.msra.mxu0 %v322
        %336 = vmatpush.msra.mxu0 %v321
        %337 = vmatpush.msra.mxu0 %v320
        %338 = vmatpush.msra.mxu0 %v319
        %339 = vmatpush.msra.mxu0 %v318
        %340 = vmatpush.msra.mxu0 %v317
        %341 = vmatpush.msra.mxu0 %v316
        %342 = vmatpush.msra.mxu0 %v315
        %343 = vmatpush.msra.mxu0 %v314
        %344 = vmatpush.msra.mxu0 %v313
        %345 = vmatmul.f32.gmra.mxu0 %v297
        %v346 = vpop.f32.mrf.mxu0
        %v347 = vadd.f32 0.0, %v346
        %348 = vmatmul.f32.gmra.mxu0 %v298
        %v349 = vpop.f32.mrf.mxu0
        %v350 = vadd.f32 0.0, %v349
        %351 = vmatmul.f32.gmra.mxu0 %v299
        %v352 = vpop.f32.mrf.mxu0
        %v353 = vadd.f32 0.0, %v352
        %354 = vmatmul.f32.gmra.mxu0 %v300
        %v355 = vpop.f32.mrf.mxu0
        %v356 = vadd.f32 0.0, %v355
        %357 = vmatmul.f32.gmra.mxu0 %v301
        %v358 = vpop.f32.mrf.mxu0
        %v359 = vadd.f32 0.0, %v358
        %360 = vmatmul.f32.gmra.mxu0 %v302
        %v361 = vpop.f32.mrf.mxu0
        %v362 = vadd.f32 0.0, %v361
        %363 = vmatmul.f32.gmra.mxu0 %v303
        %v364 = vpop.f32.mrf.mxu0
        %v365 = vadd.f32 0.0, %v364
        %366 = vmatmul.f32.gmra.mxu0 %v304
        %v367 = vpop.f32.mrf.mxu0
        %v368 = vadd.f32 0.0, %v367
        %369 = vmatmul.f32.gmra.mxu0 %v305
        %v370 = vpop.f32.mrf.mxu0
        %v371 = vadd.f32 0.0, %v370
        %372 = vmatmul.f32.gmra.mxu0 %v306
        %v373 = vpop.f32.mrf.mxu0
        %v374 = vadd.f32 0.0, %v373
        %375 = vmatmul.f32.gmra.mxu0 %v307
        %v376 = vpop.f32.mrf.mxu0
        %v377 = vadd.f32 0.0, %v376
        %378 = vmatmul.f32.gmra.mxu0 %v308
        %v379 = vpop.f32.mrf.mxu0
        %v380 = vadd.f32 0.0, %v379
        %381 = vmatmul.f32.gmra.mxu0 %v309
        %v382 = vpop.f32.mrf.mxu0
        %v383 = vadd.f32 0.0, %v382
        %384 = vmatmul.f32.gmra.mxu0 %v310
        %v385 = vpop.f32.mrf.mxu0
        %v386 = vadd.f32 0.0, %v385
        %387 = vmatmul.f32.gmra.mxu0 %v311
        %v388 = vpop.f32.mrf.mxu0
        %v389 = vadd.f32 0.0, %v388
        %390 = vmatmul.f32.gmra.mxu0 %v312
        %v391 = vpop.f32.mrf.mxu0
        %v392 = vadd.f32 0.0, %v391
        %393 = vdwg.mxu0
        %v394 = vadd.f32 %v281, %v347
        %v395 = vadd.f32 %v282, %v350
        %v396 = vadd.f32 %v283, %v353
        %v397 = vadd.f32 %v284, %v356
        %v398 = vadd.f32 %v285, %v359
        %v399 = vadd.f32 %v286, %v362
        %v400 = vadd.f32 %v287, %v365
        %v401 = vadd.f32 %v288, %v368
        %v402 = vadd.f32 %v289, %v371
        %v403 = vadd.f32 %v290, %v374
        %v404 = vadd.f32 %v291, %v377
        %v405 = vadd.f32 %v292, %v380
        %v406 = vadd.f32 %v293, %v383
        %v407 = vadd.f32 %v294, %v386
        %v408 = vadd.f32 %v295, %v389
        %v409 = vadd.f32 %v296, %v392
        %vm410 = vcmask 130048
        %411 = vst.msk [vmem:[#allocation2] sm:$0xff] %vm410, %v394
        %412 = vst.msk [vmem:[#allocation2 + $0x8] sm:$0xff] %vm410, %v395
        %413 = vst.msk [vmem:[#allocation2 + $0x10] sm:$0xff] %vm410, %v396
        %414 = vst.msk [vmem:[#allocation2 + $0x18] sm:$0xff] %vm410, %v397
        %415 = vst.msk [vmem:[#allocation2 + $0x20] sm:$0xff] %vm410, %v398
        %416 = vst.msk [vmem:[#allocation2 + $0x28] sm:$0xff] %vm410, %v399
        %417 = vst.msk [vmem:[#allocation2 + $0x30] sm:$0xff] %vm410, %v400
        %418 = vst.msk [vmem:[#allocation2 + $0x38] sm:$0xff] %vm410, %v401
        %419 = vst.msk [vmem:[#allocation2 + $0x40] sm:$0xff] %vm410, %v402
        %420 = vst.msk [vmem:[#allocation2 + $0x48] sm:$0xff] %vm410, %v403
        %421 = vst.msk [vmem:[#allocation2 + $0x50] sm:$0xff] %vm410, %v404
        %422 = vst.msk [vmem:[#allocation2 + $0x58] sm:$0xff] %vm410, %v405
        %423 = vst.msk [vmem:[#allocation2 + $0x60] sm:$0xff] %vm410, %v406
        %424 = vst.msk [vmem:[#allocation2 + $0x68] sm:$0xff] %vm410, %v407
        %425 = vst.msk [vmem:[#allocation2 + $0x70] sm:$0xff] %vm410, %v408
        %426 = vst.msk [vmem:[#allocation2 + $0x78] sm:$0xff] %vm410, %v409
        %p427 = scmp.eq.s32.totalorder %s23, 1
        // Predicated region
        $region45: #{tpu_custom_call.1} parent=35 // pred_check
          %p428 = pneg %p427
        $region46: #{tpu_custom_call.1} parent=35 // pred_check_branch
          %430 = sbr.rel (%p428) target = $region48
        $region47: #{tpu_custom_call.1} parent=35 // pred_region
          %v431 = vld [vmem:[#allocation2] sm:$0xff]
          %v432 = vld [vmem:[#allocation2 + $0x8] sm:$0xff]
          %v433 = vld [vmem:[#allocation2 + $0x10] sm:$0xff]
          %v434 = vld [vmem:[#allocation2 + $0x18] sm:$0xff]
          %v435 = vld [vmem:[#allocation2 + $0x20] sm:$0xff]
          %v436 = vld [vmem:[#allocation2 + $0x28] sm:$0xff]
          %v437 = vld [vmem:[#allocation2 + $0x30] sm:$0xff]
          %v438 = vld [vmem:[#allocation2 + $0x38] sm:$0xff]
          %v439 = vld [vmem:[#allocation2 + $0x40] sm:$0xff]
          %v440 = vld [vmem:[#allocation2 + $0x48] sm:$0xff]
          %v441 = vld [vmem:[#allocation2 + $0x50] sm:$0xff]
          %v442 = vld [vmem:[#allocation2 + $0x58] sm:$0xff]
          %v443 = vld [vmem:[#allocation2 + $0x60] sm:$0xff]
          %v444 = vld [vmem:[#allocation2 + $0x68] sm:$0xff]
          %v445 = vld [vmem:[#allocation2 + $0x70] sm:$0xff]
          %v446 = vld [vmem:[#allocation2 + $0x78] sm:$0xff]
          %v447 = vld [vmem:[%s2] sm:$0xff]
          %v448 = vld [vmem:[%s2 + $0x8] sm:$0xff]
          %v450 = vsel %vm410, %v431, 0
          %v453 = vsel %vm410, %v432, 0
          %v456 = vsel %vm410, %v433, 0
          %v459 = vsel %vm410, %v434, 0
          %v462 = vsel %vm410, %v435, 0
          %v465 = vsel %vm410, %v436, 0
          %v468 = vsel %vm410, %v437, 0
          %v471 = vsel %vm410, %v438, 0
          %v474 = vsel %vm410, %v439, 0
          %v477 = vsel %vm410, %v440, 0
          %v480 = vsel %vm410, %v441, 0
          %v483 = vsel %vm410, %v442, 0
          %v486 = vsel %vm410, %v443, 0
          %v489 = vsel %vm410, %v444, 0
          %v492 = vsel %vm410, %v445, 0
          %v495 = vsel %vm410, %v446, 0
          %497 = vmatpush.msra.mxu0 0.0
          %498 = vmatpush.msra.mxu0 0.0
          %499 = vmatpush.msra.mxu0 0.0
          %500 = vmatpush.msra.mxu0 0.0
          %501 = vmatpush.msra.mxu0 0.0
          %502 = vmatpush.msra.mxu0 0.0
          %503 = vmatpush.msra.mxu0 0.0
          %504 = vmatpush.msra.mxu0 0.0
          %505 = vmatpush.msra.mxu0 0.0
          %506 = vmatpush.msra.mxu0 0.0
          %507 = vmatpush.msra.mxu0 0.0
          %508 = vmatpush.msra.mxu0 0.0
          %509 = vmatpush.msra.mxu0 0.0
          %510 = vmatpush.msra.mxu0 0.0
          %511 = vmatpush.msra.mxu0 %v448
          %512 = vmatpush.msra.mxu0 %v447
          %513 = vmatmul.f32.gmra.mxu0 %v450
          %v514 = vpop.f32.mrf.mxu0
          %v515 = vadd.f32 0.0, %v514
          %516 = vmatmul.f32.gmra.mxu0 %v453
          %v517 = vpop.f32.mrf.mxu0
          %v518 = vadd.f32 0.0, %v517
          %519 = vmatmul.f32.gmra.mxu0 %v456
          %v520 = vpop.f32.mrf.mxu0
          %v521 = vadd.f32 0.0, %v520
          %522 = vmatmul.f32.gmra.mxu0 %v459
          %v523 = vpop.f32.mrf.mxu0
          %v524 = vadd.f32 0.0, %v523
          %525 = vmatmul.f32.gmra.mxu0 %v462
          %v526 = vpop.f32.mrf.mxu0
          %v527 = vadd.f32 0.0, %v526
          %528 = vmatmul.f32.gmra.mxu0 %v465
          %v529 = vpop.f32.mrf.mxu0
          %v530 = vadd.f32 0.0, %v529
          %531 = vmatmul.f32.gmra.mxu0 %v468
          %v532 = vpop.f32.mrf.mxu0
          %v533 = vadd.f32 0.0, %v532
          %534 = vmatmul.f32.gmra.mxu0 %v471
          %v535 = vpop.f32.mrf.mxu0
          %v536 = vadd.f32 0.0, %v535
          %537 = vmatmul.f32.gmra.mxu0 %v474
          %v538 = vpop.f32.mrf.mxu0
          %v539 = vadd.f32 0.0, %v538
          %540 = vmatmul.f32.gmra.mxu0 %v477
          %v541 = vpop.f32.mrf.mxu0
          %v542 = vadd.f32 0.0, %v541
          %543 = vmatmul.f32.gmra.mxu0 %v480
          %v544 = vpop.f32.mrf.mxu0
          %v545 = vadd.f32 0.0, %v544
          %546 = vmatmul.f32.gmra.mxu0 %v483
          %v547 = vpop.f32.mrf.mxu0
          %v548 = vadd.f32 0.0, %v547
          %549 = vmatmul.f32.gmra.mxu0 %v486
          %v550 = vpop.f32.mrf.mxu0
          %v551 = vadd.f32 0.0, %v550
          %552 = vmatmul.f32.gmra.mxu0 %v489
          %v553 = vpop.f32.mrf.mxu0
          %v554 = vadd.f32 0.0, %v553
          %555 = vmatmul.f32.gmra.mxu0 %v492
          %v556 = vpop.f32.mrf.mxu0
          %v557 = vadd.f32 0.0, %v556
          %558 = vmatmul.f32.gmra.mxu0 %v495
          %v559 = vpop.f32.mrf.mxu0
          %v560 = vadd.f32 0.0, %v559
          %561 = vdwg.mxu0
          %v562 = vld [vmem:[%s3] sm:$0xff]
          %v563 = vld [vmem:[%s3 + $0x8] sm:$0xff]
          %v564 = vld [vmem:[%s3 + $0x10] sm:$0xff]
          %v565 = vld [vmem:[%s3 + $0x18] sm:$0xff]
          %vm566 = vcmask 261120
          %v568 = vsel %vm566, %v515, 0
          %v571 = vsel %vm566, %v518, 0
          %v574 = vsel %vm566, %v521, 0
          %v577 = vsel %vm566, %v524, 0
          %v580 = vsel %vm566, %v527, 0
          %v583 = vsel %vm566, %v530, 0
          %v586 = vsel %vm566, %v533, 0
          %v589 = vsel %vm566, %v536, 0
          %v592 = vsel %vm566, %v539, 0
          %v595 = vsel %vm566, %v542, 0
          %v598 = vsel %vm566, %v545, 0
          %v601 = vsel %vm566, %v548, 0
          %v604 = vsel %vm566, %v551, 0
          %v607 = vsel %vm566, %v554, 0
          %v610 = vsel %vm566, %v557, 0
          %v613 = vsel %vm566, %v560, 0
          %615 = vmatpush.msra.mxu0 0.0
          %616 = vmatpush.msra.mxu0 0.0
          %617 = vmatpush.msra.mxu0 0.0
          %618 = vmatpush.msra.mxu0 0.0
          %619 = vmatpush.msra.mxu0 0.0
          %620 = vmatpush.msra.mxu0 0.0
          %621 = vmatpush.msra.mxu0 0.0
          %622 = vmatpush.msra.mxu0 0.0
          %623 = vmatpush.msra.mxu0 0.0
          %624 = vmatpush.msra.mxu0 0.0
          %625 = vmatpush.msra.mxu0 0.0
          %626 = vmatpush.msra.mxu0 0.0
          %627 = vmatpush.msra.mxu0 %v565
          %628 = vmatpush.msra.mxu0 %v564
          %629 = vmatpush.msra.mxu0 %v563
          %630 = vmatpush.msra.mxu0 %v562
          %631 = vmatmul.f32.gmra.mxu0 %v568
          %v632 = vpop.f32.mrf.mxu0
          %v633 = vadd.f32 0.0, %v632
          %634 = vmatmul.f32.gmra.mxu0 %v571
          %v635 = vpop.f32.mrf.mxu0
          %v636 = vadd.f32 0.0, %v635
          %637 = vmatmul.f32.gmra.mxu0 %v574
          %v638 = vpop.f32.mrf.mxu0
          %v639 = vadd.f32 0.0, %v638
          %640 = vmatmul.f32.gmra.mxu0 %v577
          %v641 = vpop.f32.mrf.mxu0
          %v642 = vadd.f32 0.0, %v641
          %643 = vmatmul.f32.gmra.mxu0 %v580
          %v644 = vpop.f32.mrf.mxu0
          %v645 = vadd.f32 0.0, %v644
          %646 = vmatmul.f32.gmra.mxu0 %v583
          %v647 = vpop.f32.mrf.mxu0
          %v648 = vadd.f32 0.0, %v647
          %649 = vmatmul.f32.gmra.mxu0 %v586
          %v650 = vpop.f32.mrf.mxu0
          %v651 = vadd.f32 0.0, %v650
          %652 = vmatmul.f32.gmra.mxu0 %v589
          %v653 = vpop.f32.mrf.mxu0
          %v654 = vadd.f32 0.0, %v653
          %655 = vmatmul.f32.gmra.mxu0 %v592
          %v656 = vpop.f32.mrf.mxu0
          %v657 = vadd.f32 0.0, %v656
          %658 = vmatmul.f32.gmra.mxu0 %v595
          %v659 = vpop.f32.mrf.mxu0
          %v660 = vadd.f32 0.0, %v659
          %661 = vmatmul.f32.gmra.mxu0 %v598
          %v662 = vpop.f32.mrf.mxu0
          %v663 = vadd.f32 0.0, %v662
          %664 = vmatmul.f32.gmra.mxu0 %v601
          %v665 = vpop.f32.mrf.mxu0
          %v666 = vadd.f32 0.0, %v665
          %667 = vmatmul.f32.gmra.mxu0 %v604
          %v668 = vpop.f32.mrf.mxu0
          %v669 = vadd.f32 0.0, %v668
          %670 = vmatmul.f32.gmra.mxu0 %v607
          %v671 = vpop.f32.mrf.mxu0
          %v672 = vadd.f32 0.0, %v671
          %673 = vmatmul.f32.gmra.mxu0 %v610
          %v674 = vpop.f32.mrf.mxu0
          %v675 = vadd.f32 0.0, %v674
          %676 = vmatmul.f32.gmra.mxu0 %v613
          %v677 = vpop.f32.mrf.mxu0
          %v678 = vadd.f32 0.0, %v677
          %679 = vdwg.mxu0
          %680 = vst.msk [vmem:[%s258] sm:$0xff] %vm566, %v633
          %681 = vst.msk [vmem:[%s258 + $0x8] sm:$0xff] %vm566, %v636
          %682 = vst.msk [vmem:[%s258 + $0x10] sm:$0xff] %vm566, %v639
          %683 = vst.msk [vmem:[%s258 + $0x18] sm:$0xff] %vm566, %v642
          %684 = vst.msk [vmem:[%s258 + $0x20] sm:$0xff] %vm566, %v645
          %685 = vst.msk [vmem:[%s258 + $0x28] sm:$0xff] %vm566, %v648
          %686 = vst.msk [vmem:[%s258 + $0x30] sm:$0xff] %vm566, %v651
          %687 = vst.msk [vmem:[%s258 + $0x38] sm:$0xff] %vm566, %v654
          %688 = vst.msk [vmem:[%s258 + $0x40] sm:$0xff] %vm566, %v657
          %689 = vst.msk [vmem:[%s258 + $0x48] sm:$0xff] %vm566, %v660
          %690 = vst.msk [vmem:[%s258 + $0x50] sm:$0xff] %vm566, %v663
          %691 = vst.msk [vmem:[%s258 + $0x58] sm:$0xff] %vm566, %v666
          %692 = vst.msk [vmem:[%s258 + $0x60] sm:$0xff] %vm566, %v669
          %693 = vst.msk [vmem:[%s258 + $0x68] sm:$0xff] %vm566, %v672
          %694 = vst.msk [vmem:[%s258 + $0x70] sm:$0xff] %vm566, %v675
          %695 = vst.msk [vmem:[%s258 + $0x78] sm:$0xff] %vm566, %v678
        $region48: #{tpu_custom_call.1} parent=35 // pred_fallthru
          _
        %s696 = smul.u32 16, %s22
        %p697 = scmp.lt.s32.totalorder %s696, 31
        %s698 = scalar_select %p697, %s696, 31
        %s699 = smul.addr %s698, 8
        %s700 = scalar_lea.vmem %s4, %s699
        // Predicated region
        $region49: #{tpu_custom_call.1} parent=35 // pred_check
          %p701 = pneg %p144
        $region50: #{tpu_custom_call.1} parent=35 // pred_check_branch
          %703 = sbr.rel (%p701) target = $region52
        $region51: #{tpu_custom_call.1} parent=35 // pred_region
          %s704 = smul.u32 16, %s22
        $region52: #{tpu_custom_call.1} parent=35 // pred_fallthru
          _
      $region36: #{tpu_custom_call.1} parent=5 // pred_fallthru
        _
      %p705 = scmp.le.s32.totalorder 2, %s13
      // Predicated region
      $region53: #{tpu_custom_call.1} parent=5 // pred_check
        %p706 = pneg %p705
      $region54: #{tpu_custom_call.1} parent=5 // pred_check_branch
        %708 = sbr.rel (%p706) target = $region56
      $region55: #{tpu_custom_call.1} parent=5 // pred_region
        %s709 = ssub.s32 %s13, 2
        // Predicated region
        $region57: #{tpu_custom_call.1} parent=55 // pred_check
          %p710 = pneg %p150
        $region58: #{tpu_custom_call.1} parent=55 // pred_check_branch
          %712 = sbr.rel (%p710) target = $region60
        $region59: #{tpu_custom_call.1} parent=55 // pred_region
          %s713 = smul.u32 16, %s24
          %p714 = scmp.lt.s32.totalorder %s713, 31
          %s715 = scalar_select %p714, %s713, 31
          %s716 = smul.addr %s715, 8
          %s717 = scalar_lea.vmem %s4, %s716
        $region60: #{tpu_custom_call.1} parent=55 // pred_fallthru
          _
      $region56: #{tpu_custom_call.1} parent=5 // pred_fallthru
        _
    $region6: #{tpu_custom_call.1} parent=1 // loop_footer
      %s17 = sadd.s32 1, %s13
    $region7: #{tpu_custom_call.1} parent=1 // loop_footer_branch
      %12 = sbr.rel target = $region3
    $region8: #{tpu_custom_call.1} parent=1 // loop_exit
      _
    %718 = vsyncpa [#allocation4], 1
    %s719 = scalar_lea.sflag [#allocation4], 1
    %720 = vsyncpa %s719, 1

</llo_original>
